<compile_context>
chip_gen: v7x
topology: tpu7x:2x2x1
jax: 0.10.0
libtpu: 0.0.40
codegen_flags: <defaults>
</compile_context>

<pallas_src>
import functools

import jax
import jax.numpy as jnp
from jax.experimental import pallas as pl
from jax.experimental.pallas import tpu as pltpu

LANE = 128        # TPU lane width (last dim)
BF16_SUBLANE = 16  # bf16 sublane packing (second-to-last dim granularity)


def _round_up(n, m):
    return ((n + m - 1) // m) * m


def _mlp_kernel(x_ref, w1_ref, b1_ref, w2_ref, b2_ref, w3_ref, b3_ref, o_ref):
    """Fused 3-layer MLP on one batch tile.

    x arrives f32 and is cast to bf16 on the VPU (free — kernel is DMA/MXU bound).
    MXU inputs are bf16 with f32 accumulation; bias add / ReLU stay in f32 so the
    v5e VPU never sees bf16 elementwise ops.
    """
    x = x_ref[...].astype(w1_ref.dtype)
    # fc1 + ReLU
    h1 = jnp.dot(x, w1_ref[...], preferred_element_type=jnp.float32)
    h1 = jnp.maximum(h1 + b1_ref[...], 0.0)
    # fc2 + ReLU
    h2 = jnp.dot(h1.astype(w2_ref.dtype), w2_ref[...],
                 preferred_element_type=jnp.float32)
    h2 = jnp.maximum(h2 + b2_ref[...], 0.0)
    # fc3 (no activation). w3/b3 are lane-padded to 128 for a standard MXU shape;
    # only the real output columns are stored to HBM (narrow o_ref).
    out = jnp.dot(h2.astype(w3_ref.dtype), w3_ref[...],
                  preferred_element_type=jnp.float32) + b3_ref[...]
    o_ref[...] = out[:, :o_ref.shape[1]].astype(o_ref.dtype)


def prepare_params(w1, b1, w2, b2, w3, b3, *, compute_dtype=jnp.bfloat16):
    """One-time parameter prep (do NOT call per forward pass).

    Takes PyTorch-convention (out, in) weights; returns (in, out)-layout weights:
      * w1: K dim rounded to 16 only (bf16 sublane packing) — no 128-lane pad of x.
      * hidden dim padded to exactly 128 lanes (one MXU tile, serves v5e/v6e/v7x).
      * w3/b3 lane-padded to 128 for the MXU; the HBM output stays narrow.
    Biases are zero-padded f32 rows (keeps padded hidden lanes exactly 0 post-ReLU).
    """
    w1 = jnp.asarray(w1, jnp.float32)
    w2 = jnp.asarray(w2, jnp.float32)
    w3 = jnp.asarray(w3, jnp.float32)
    in_dim, hidden = w1.shape[1], w1.shape[0]
    out_dim = w3.shape[0]

    in_p = _round_up(in_dim, BF16_SUBLANE)
    hid_p = _round_up(hidden, LANE)
    out_p = _round_up(out_dim, LANE)

    def pad_to(a, rows, cols):
        return jnp.pad(a, ((0, rows - a.shape[0]), (0, cols - a.shape[1])))

    def pad_b(b, cols):
        b = jnp.asarray(b, jnp.float32).reshape(1, -1)
        return jnp.pad(b, ((0, 0), (0, cols - b.shape[1])))

    params = dict(
        w1=pad_to(w1.T, in_p, hid_p).astype(compute_dtype),
        b1=pad_b(b1, hid_p),
        w2=pad_to(w2.T, hid_p, hid_p).astype(compute_dtype),
        b2=pad_b(b2, hid_p),
        w3=pad_to(w3.T, hid_p, out_p).astype(compute_dtype),
        b3=pad_b(b3, out_p),
    )
    logical_dims = (in_dim, hidden, out_dim)
    return params, logical_dims


@functools.partial(
    jax.jit,
    static_argnames=("logical_dims", "batch_tile", "min_grid_steps",
                     "min_rows_for_pallas"))
def reduced_nn_forward(x, params, *, logical_dims, batch_tile=1024,
                       min_grid_steps=2, min_rows_for_pallas=32):
    """Runs the fused reduced MLP. x: (B, input_dim) f32 -> (B, out_dim) f32."""
    in_dim, hidden, out_dim = logical_dims
    w1, b1 = params["w1"], params["b1"]
    w2, b2 = params["w2"], params["b2"]
    w3, b3 = params["w3"], params["b3"]
    in_p, hid_p = w1.shape
    out_p = w3.shape[1]
    B = x.shape[0]
    assert x.shape[1] == in_dim

    # Tiny-batch fallback: pallas_call launch + per-step grid overhead dominates the
    # ~3 Kflop/row of real work; a plain fused XLA dot chain wins on every generation.
    if B < min_rows_for_pallas:
        xp = x if in_p == in_dim else jnp.pad(x, ((0, 0), (0, in_p - in_dim)))
        h1 = jnp.maximum(
            jnp.dot(xp.astype(w1.dtype), w1, preferred_element_type=jnp.float32) + b1, 0.0)
        h2 = jnp.maximum(
            jnp.dot(h1.astype(w2.dtype), w2, preferred_element_type=jnp.float32) + b2, 0.0)
        out = jnp.dot(h2.astype(w3.dtype), w3, preferred_element_type=jnp.float32) + b3
        return out[:, :out_dim]

    # Batch tiling: at least `min_grid_steps` steps (keeps both v7x TensorCores busy and
    # the input/output double-buffers actually overlapping); tile is a multiple of 16
    # (bf16 sublane packing); padding waste bounded by < one tile, not a full max tile.
    n_steps = max(pl.cdiv(B, batch_tile), min_grid_steps)
    tb = _round_up(pl.cdiv(B, n_steps), BF16_SUBLANE)
    pb = _round_up(B, tb)
    grid = (pb // tb,)

    # Only pad when actually needed (demo shapes need none). x stays f32 here; the bf16
    # cast happens on the VPU inside the kernel, so no wrapper pad/cast HBM pass.
    xp = x
    if pb != B or in_p != in_dim:
        xp = jnp.pad(x, ((0, pb - B), (0, in_p - in_dim)))

    # Constant block index -> operand is fetched once and stays VMEM-resident.
    resident = lambda i: (0, 0)
    # TODO(synk): if MLIR ever shows per-step re-DMA of these resident operands, add
    # pipeline_mode=pl.Buffered(1) to the six weight/bias BlockSpecs.

    # Real (unpadded) work for the XLA scheduler.
    mm_terms = in_dim * hidden + hidden * hidden + hidden * out_dim
    flops = 2 * B * mm_terms
    bytes_accessed = (B * in_dim * 4            # x in (f32)
                      + 2 * mm_terms            # bf16 weights
                      + 4 * (2 * hidden + out_dim)  # f32 biases
                      + B * out_dim * 4)        # narrow f32 output

    out = pl.pallas_call(
        _mlp_kernel,
        out_shape=jax.ShapeDtypeStruct((pb, out_dim), jnp.float32),
        grid=grid,
        in_specs=[
            pl.BlockSpec((tb, in_p), lambda i: (i, 0)),     # x tile (pipelined, f32)
            pl.BlockSpec((in_p, hid_p), resident),          # w1 (bf16)
            pl.BlockSpec((1, hid_p), resident),             # b1 (f32)
            pl.BlockSpec((hid_p, hid_p), resident),         # w2 (bf16)
            pl.BlockSpec((1, hid_p), resident),             # b2 (f32)
            pl.BlockSpec((hid_p, out_p), resident),         # w3 (bf16, lane-padded)
            pl.BlockSpec((1, out_p), resident),             # b3 (f32, lane-padded)
        ],
        out_specs=pl.BlockSpec((tb, out_dim), lambda i: (i, 0)),   # narrow writeback
        compiler_params=pltpu.CompilerParams(
            dimension_semantics=("parallel",),
            # Conservative: well under v7x's 64 MiB physical VMEM; actual use is tiny.
            vmem_limit_bytes=32 * 1024 * 1024,
        ),
        cost_estimate=pl.CostEstimate(
            flops=flops, transcendentals=0, bytes_accessed=bytes_accessed),
    )(xp, w1, b1, w2, b2, w3, b3)

    return out[:B] if pb != B else out


def _reference_forward(x, w1, b1, w2, b2, w3, b3):
    """Pure-f32 JAX reference matching the PyTorch module semantics."""
    h1 = jnp.maximum(x @ w1.T + b1, 0.0)
    h2 = jnp.maximum(h1 @ w2.T + b2, 0.0)
    return h2 @ w3.T + b3


if __name__ == "__main__":
    # Small, module-consistent shapes.
    batch = 64
    input_dim = 16
    hidden_dim = 64              # original network hidden size
    hidden_half = hidden_dim // 2
    output_dim = 4

    key = jax.random.PRNGKey(0)
    keys = jax.random.split(key, 8)

    # "Original" network parameters (PyTorch nn.Linear convention: W is (out, in)).
    fc1_w = jax.random.normal(keys[0], (hidden_dim, input_dim), jnp.float32) * 0.1
    fc1_b = jax.random.normal(keys[1], (hidden_dim,), jnp.float32) * 0.1
    fc2_w = jax.random.normal(keys[2], (hidden_dim, hidden_dim), jnp.float32) * 0.1
    fc2_b = jax.random.normal(keys[3], (hidden_dim,), jnp.float32) * 0.1
    fc3_w = jax.random.normal(keys[4], (output_dim, hidden_dim), jnp.float32) * 0.1
    fc3_b = jax.random.normal(keys[5], (output_dim,), jnp.float32) * 0.1

    # Reduction matrix R: (hidden_half, hidden_dim).
    R = jax.random.normal(keys[6], (hidden_half, hidden_dim), jnp.float32) * 0.1

    # Reduced parameters, exactly as in ReducedNN.__init__ (one-time plain-JAX glue).
    r_fc1_w = R @ fc1_w                      # (hidden_half, input_dim)
    r_fc1_b = (R @ fc1_b[:, None])[:, 0]     # (hidden_half,)
    r_fc2_w = R @ fc2_w @ R.T                # (hidden_half, hidden_half)
    r_fc2_b = (R @ fc2_b[:, None])[:, 0]     # (hidden_half,)
    r_fc3_w = fc3_w @ R.T                    # (output_dim, hidden_half)
    r_fc3_b = fc3_b                          # (output_dim,)

    x = jax.random.normal(keys[7], (batch, input_dim), jnp.float32)

    # One-time parameter preparation (transpose / pad / bf16 cast), hoisted out of
    # the forward path.
    params, logical_dims = prepare_params(r_fc1_w, r_fc1_b, r_fc2_w, r_fc2_b,
                                          r_fc3_w, r_fc3_b)

    # Pallas path (batch >= min_rows_for_pallas -> 2-step batch-tiled grid).
    out = reduced_nn_forward(x, params, logical_dims=logical_dims)
    out = jax.block_until_ready(out)

    ref = _reference_forward(x, r_fc1_w, r_fc1_b, r_fc2_w, r_fc2_b, r_fc3_w, r_fc3_b)
    assert out.shape == (batch, output_dim)
    # bf16 MXU inputs (f32 accumulation) vs f32 reference -> tolerance covers bf16 rounding.
    assert jnp.allclose(out, ref, atol=2e-2, rtol=2e-2), (
        f"max abs err {jnp.max(jnp.abs(out - ref))}")

    # Tiny-batch fallback path (plain fused XLA dots, no pallas_call launch overhead).
    out_small = jax.block_until_ready(
        reduced_nn_forward(x[:4], params, logical_dims=logical_dims))
    assert jnp.allclose(out_small, ref[:4], atol=2e-2, rtol=2e-2)

    print("KERNEL_OK")
</pallas_src>

<mosaic_0001>
module attributes {stable_mosaic.version = 11 : i64} {
  func.func @_mlp_kernel(%arg0: i32, %arg1: memref<32x16xf32, #tpu.memory_space<vmem>>, %arg2: memref<16x128xbf16, #tpu.memory_space<vmem>>, %arg3: memref<1x128xf32, #tpu.memory_space<vmem>>, %arg4: memref<128x128xbf16, #tpu.memory_space<vmem>>, %arg5: memref<1x128xf32, #tpu.memory_space<vmem>>, %arg6: memref<128x128xbf16, #tpu.memory_space<vmem>>, %arg7: memref<1x128xf32, #tpu.memory_space<vmem>>, %arg8: memref<32x4xf32, #tpu.memory_space<vmem>>) attributes {dimension_semantics = [#tpu.dimension_semantics<parallel>], iteration_bounds = array<i64: 2>, scalar_prefetch = 0 : i64, scratch_operands = 0 : i64, tpu.core_type = #tpu.core_type<tc>, window_params = [{transform_indices = @transform_0, window_bounds = array<i64: 32, 16>}, {pipeline_mode = #tpu.pipeline_mode<synchronous>, transform_indices = @transform_1, window_bounds = array<i64: 16, 128>}, {pipeline_mode = #tpu.pipeline_mode<synchronous>, transform_indices = @transform_2, window_bounds = array<i64: 1, 128>}, {pipeline_mode = #tpu.pipeline_mode<synchronous>, transform_indices = @transform_3, window_bounds = array<i64: 128, 128>}, {pipeline_mode = #tpu.pipeline_mode<synchronous>, transform_indices = @transform_4, window_bounds = array<i64: 1, 128>}, {pipeline_mode = #tpu.pipeline_mode<synchronous>, transform_indices = @transform_5, window_bounds = array<i64: 128, 128>}, {pipeline_mode = #tpu.pipeline_mode<synchronous>, transform_indices = @transform_6, window_bounds = array<i64: 1, 128>}, {transform_indices = @transform_7, window_bounds = array<i64: 32, 4>}]} {
    %c0 = arith.constant 0 : index
    %c0_0 = arith.constant 0 : index
    %0 = vector.load %arg1[%c0, %c0_0] : memref<32x16xf32, #tpu.memory_space<vmem>>, vector<32x16xf32>
    %1 = arith.truncf %0 : vector<32x16xf32> to vector<32x16xbf16>
    %c0_1 = arith.constant 0 : index
    %c0_2 = arith.constant 0 : index
    %2 = vector.load %arg2[%c0_1, %c0_2] : memref<16x128xbf16, #tpu.memory_space<vmem>>, vector<16x128xbf16>
    %cst = arith.constant dense<0.000000e+00> : vector<32x128xf32>
    %3 = tpu.matmul %1, %2, %cst {dimension_numbers = #tpu.dot_dimension_numbers<[1], [0], [0], [1], [0, 0, 1, 1], [], []>} : vector<32x16xbf16>, vector<16x128xbf16>, vector<32x128xf32> -> vector<32x128xf32>
    %c0_3 = arith.constant 0 : index
    %c0_4 = arith.constant 0 : index
    %4 = vector.load %arg3[%c0_3, %c0_4] : memref<1x128xf32, #tpu.memory_space<vmem>>, vector<1x128xf32>
    %5 = vector.broadcast %4 : vector<1x128xf32> to vector<32x128xf32>
    %6 = arith.addf %3, %5 : vector<32x128xf32>
    %cst_5 = arith.constant 0.000000e+00 : f32
    %7 = vector.broadcast %cst_5 : f32 to vector<32x128xf32>
    %8 = arith.maximumf %6, %7 : vector<32x128xf32>
    %9 = arith.truncf %8 : vector<32x128xf32> to vector<32x128xbf16>
    %c0_6 = arith.constant 0 : index
    %c0_7 = arith.constant 0 : index
    %10 = vector.load %arg4[%c0_6, %c0_7] : memref<128x128xbf16, #tpu.memory_space<vmem>>, vector<128x128xbf16>
    %cst_8 = arith.constant dense<0.000000e+00> : vector<32x128xf32>
    %11 = tpu.matmul %9, %10, %cst_8 {dimension_numbers = #tpu.dot_dimension_numbers<[1], [0], [0], [1], [0, 0, 1, 1], [], []>} : vector<32x128xbf16>, vector<128x128xbf16>, vector<32x128xf32> -> vector<32x128xf32>
    %c0_9 = arith.constant 0 : index
    %c0_10 = arith.constant 0 : index
    %12 = vector.load %arg5[%c0_9, %c0_10] : memref<1x128xf32, #tpu.memory_space<vmem>>, vector<1x128xf32>
    %13 = vector.broadcast %12 : vector<1x128xf32> to vector<32x128xf32>
    %14 = arith.addf %11, %13 : vector<32x128xf32>
    %cst_11 = arith.constant 0.000000e+00 : f32
    %15 = vector.broadcast %cst_11 : f32 to vector<32x128xf32>
    %16 = arith.maximumf %14, %15 : vector<32x128xf32>
    %17 = arith.truncf %16 : vector<32x128xf32> to vector<32x128xbf16>
    %c0_12 = arith.constant 0 : index
    %c0_13 = arith.constant 0 : index
    %18 = vector.load %arg6[%c0_12, %c0_13] : memref<128x128xbf16, #tpu.memory_space<vmem>>, vector<128x128xbf16>
    %cst_14 = arith.constant dense<0.000000e+00> : vector<32x128xf32>
    %19 = tpu.matmul %17, %18, %cst_14 {dimension_numbers = #tpu.dot_dimension_numbers<[1], [0], [0], [1], [0, 0, 1, 1], [], []>} : vector<32x128xbf16>, vector<128x128xbf16>, vector<32x128xf32> -> vector<32x128xf32>
    %c0_15 = arith.constant 0 : index
    %c0_16 = arith.constant 0 : index
    %20 = vector.load %arg7[%c0_15, %c0_16] : memref<1x128xf32, #tpu.memory_space<vmem>>, vector<1x128xf32>
    %21 = vector.broadcast %20 : vector<1x128xf32> to vector<32x128xf32>
    %22 = arith.addf %19, %21 : vector<32x128xf32>
    %23 = vector.extract_strided_slice %22 {offsets = [0, 0], sizes = [32, 4], strides = [1, 1]} : vector<32x128xf32> to vector<32x4xf32>
    %c0_17 = arith.constant 0 : index
    %c0_18 = arith.constant 0 : index
    %24 = vector.load %arg8[%c0_17, %c0_18] : memref<32x4xf32, #tpu.memory_space<vmem>>, vector<32x4xf32>
    tpu.vector_store %arg8[%c0_17, %c0_18], %23 {strides = array<i32>} : memref<32x4xf32, #tpu.memory_space<vmem>>, vector<32x4xf32>,
    return
  }
  func.func @transform_0(%arg0: i32) -> (i32, i32) {
    %c0_i32 = arith.constant 0 : i32
    %c0_i32_0 = arith.constant 0 : i32
    return %arg0, %c0_i32 : i32, i32
  }
  func.func @transform_1(%arg0: i32) -> (i32, i32) {
    %c0_i32 = arith.constant 0 : i32
    %c0_i32_0 = arith.constant 0 : i32
    %c0_i32_1 = arith.constant 0 : i32
    return %c0_i32, %c0_i32_0 : i32, i32
  }
  func.func @transform_2(%arg0: i32) -> (i32, i32) {
    %c0_i32 = arith.constant 0 : i32
    %c0_i32_0 = arith.constant 0 : i32
    %c0_i32_1 = arith.constant 0 : i32
    return %c0_i32, %c0_i32_0 : i32, i32
  }
  func.func @transform_3(%arg0: i32) -> (i32, i32) {
    %c0_i32 = arith.constant 0 : i32
    %c0_i32_0 = arith.constant 0 : i32
    %c0_i32_1 = arith.constant 0 : i32
    return %c0_i32, %c0_i32_0 : i32, i32
  }
  func.func @transform_4(%arg0: i32) -> (i32, i32) {
    %c0_i32 = arith.constant 0 : i32
    %c0_i32_0 = arith.constant 0 : i32
    %c0_i32_1 = arith.constant 0 : i32
    return %c0_i32, %c0_i32_0 : i32, i32
  }
  func.func @transform_5(%arg0: i32) -> (i32, i32) {
    %c0_i32 = arith.constant 0 : i32
    %c0_i32_0 = arith.constant 0 : i32
    %c0_i32_1 = arith.constant 0 : i32
    return %c0_i32, %c0_i32_0 : i32, i32
  }
  func.func @transform_6(%arg0: i32) -> (i32, i32) {
    %c0_i32 = arith.constant 0 : i32
    %c0_i32_0 = arith.constant 0 : i32
    %c0_i32_1 = arith.constant 0 : i32
    return %c0_i32, %c0_i32_0 : i32, i32
  }
  func.func @transform_7(%arg0: i32) -> (i32, i32) {
    %c0_i32 = arith.constant 0 : i32
    %c0_i32_0 = arith.constant 0 : i32
    return %arg0, %c0_i32 : i32, i32
  }
}

</mosaic_0001>

<llo_original>
// kernel: reduced_nn_forward.1
$region0: #{reduced_nn_forward.1}
  #allocation0 [shape = 'u32[]', space=smem, size = 0x4, offset = 0x4, fixed_abs, tag = 'smem constant byte address 0x4 - core index']
  #allocation1 [shape = 'u32[144,128]{1,0:T(1,128)}', space=vmem, size = 0x12000, scoped, tag = 'internal scratch']
  %s0 = inlined_call_operand.vmem [shape: f32[64,16], index: 0, kind: input, shape index: {}]
  %s1 = inlined_call_operand.vmem [shape: bf16[16,128], index: 1, kind: input, shape index: {}]
  %s2 = inlined_call_operand.vmem [shape: f32[1,128], index: 2, kind: input, shape index: {}]
  %s3 = inlined_call_operand.vmem [shape: bf16[128,128], index: 3, kind: input, shape index: {}]
  %s4 = inlined_call_operand.vmem [shape: f32[1,128], index: 4, kind: input, shape index: {}]
  %s5 = inlined_call_operand.hbm [shape: bf16[128,128], index: 5, kind: input, shape index: {}]
  %s6 = inlined_call_operand.vmem [shape: f32[1,128], index: 6, kind: input, shape index: {}]
  %s7 = inlined_call_operand.vmem [shape: f32[64,4], index: 7, kind: output, shape index: {}]
  %s8 = sld [smem:[#allocation0]]
  $region65: #{reduced_nn_forward.1} parent=0
    _
  %s10 = ssub.s32 1, %s8
  %s11 = scalar_select 0, %s10, %s8
  $region1: #{reduced_nn_forward.1} parent=0
    #allocation2 [shape = 'u8[32768]{0}', space=vmem, size = 0x8000, scoped, tag = 'input window, operand 5, single buffered']
    #allocation3 [shape = 's32[2]{0}', space=sflag, size = 0x8, scoped, tag = 'scoped memory for reduced_nn_forward.1']
    %12 = vsyncpa [#allocation3], 0
    loop: start=0, step=1, limit=4
    $region2: #{reduced_nn_forward.1} parent=1 // loop_pre_header
      _
    $region3: #{reduced_nn_forward.1} parent=1 // loop_header
      %s14 = sphi 0, %s18
      %p15 = scmp.ge.s32.totalorder %s14, 4
      %s24 = sphi 0, %s26
      %s27 = sphi 0, %s24
      %s28 = sphi 0, %s27
      %s44 = sphi 0, %s28
      %s48 = sphi 0, %s48
      %s50 = sphi 0, %s48
      %s51 = sphi 0, %s50
      %s65 = sphi 0, %s51
      %s69 = sphi 0, %s69
      %s71 = sphi 0, %s69
      %s72 = sphi 0, %s71
      %s86 = sphi 0, %s72
      %s90 = sphi 0, %s90
      %s92 = sphi 0, %s90
      %s93 = sphi 0, %s92
      %s107 = sphi 0, %s93
      %s111 = sphi 0, %s111
      %s113 = sphi 0, %s111
      %s114 = sphi 0, %s113
      %s128 = sphi 0, %s114
      %s132 = sphi 0, %s132
      %s134 = sphi 0, %s132
      %s135 = sphi 0, %s134
      %s149 = sphi 0, %s135
      %s153 = sphi 0, %s153
      %s155 = sphi 0, %s153
      %s156 = sphi 0, %s155
      %s170 = sphi 0, %s156
      %s176 = sphi 0, %s178
      %s179 = sphi 0, %s176
      %s180 = sphi 0, %s179
      %s196 = sphi 0, %s180
    $region4: #{reduced_nn_forward.1} parent=1 // loop_header_branch
      %17 = sbr.rel (%p15) target = $region8
    $region5: #{reduced_nn_forward.1} parent=1 // loop_body
      %s19 = ssub.s32 %s14, 1
      %s20 = ssub.s32 %s14, 2
      %s21 = sadd.s32 %s14, 1
      %s22 = ssub.s32 %s14, %s21
      %p23 = scmp.eq.s32.totalorder %s22, 0
      %s25 = sadd.s32 %s24, 1
      %s26 = scalar_select %p23, %s24, %s25
      %p29 = pneg %p23
      %p30 = scmp.eq.s32.totalorder %s14, 1
      %p31 = por %p29, %p30
      %p32 = scmp.ne.s32.totalorder %s24, %s27
      %p33 = scmp.eq.s32.totalorder %s14, 0
      %p34 = por %p32, %p33
      %p35 = scmp.ne.s32.totalorder %s24, %s27
      %p36 = scmp.eq.s32.totalorder %s19, 1
      %p37 = por %p35, %p36
      %p38 = scmp.ne.s32.totalorder %s27, %s28
      %p39 = scmp.eq.s32.totalorder %s19, 0
      %p40 = por %p38, %p39
      %p41 = scmp.ne.s32.totalorder %s27, %s28
      %p42 = scmp.eq.s32.totalorder %s20, 1
      %p43 = por %p41, %p42
      %p45 = scmp.ne.s32.totalorder %s28, %s44
      %p46 = scmp.eq.s32.totalorder %s20, 0
      %p47 = por %p45, %p46
      %s49 = sadd.s32 %s48, 1
      %p52 = scmp.eq.s32.totalorder %s14, 1
      %p53 = scmp.ne.s32.totalorder %s48, %s50
      %p54 = scmp.eq.s32.totalorder %s14, 0
      %p55 = por %p53, %p54
      %p56 = scmp.ne.s32.totalorder %s48, %s50
      %p57 = scmp.eq.s32.totalorder %s19, 1
      %p58 = por %p56, %p57
      %p59 = scmp.ne.s32.totalorder %s50, %s51
      %p60 = scmp.eq.s32.totalorder %s19, 0
      %p61 = por %p59, %p60
      %p62 = scmp.ne.s32.totalorder %s50, %s51
      %p63 = scmp.eq.s32.totalorder %s20, 1
      %p64 = por %p62, %p63
      %p66 = scmp.ne.s32.totalorder %s51, %s65
      %p67 = scmp.eq.s32.totalorder %s20, 0
      %p68 = por %p66, %p67
      %s70 = sadd.s32 %s69, 1
      %p73 = scmp.eq.s32.totalorder %s14, 1
      %p74 = scmp.ne.s32.totalorder %s69, %s71
      %p75 = scmp.eq.s32.totalorder %s14, 0
      %p76 = por %p74, %p75
      %p77 = scmp.ne.s32.totalorder %s69, %s71
      %p78 = scmp.eq.s32.totalorder %s19, 1
      %p79 = por %p77, %p78
      %p80 = scmp.ne.s32.totalorder %s71, %s72
      %p81 = scmp.eq.s32.totalorder %s19, 0
      %p82 = por %p80, %p81
      %p83 = scmp.ne.s32.totalorder %s71, %s72
      %p84 = scmp.eq.s32.totalorder %s20, 1
      %p85 = por %p83, %p84
      %p87 = scmp.ne.s32.totalorder %s72, %s86
      %p88 = scmp.eq.s32.totalorder %s20, 0
      %p89 = por %p87, %p88
      %s91 = sadd.s32 %s90, 1
      %p94 = scmp.eq.s32.totalorder %s14, 1
      %p95 = scmp.ne.s32.totalorder %s90, %s92
      %p96 = scmp.eq.s32.totalorder %s14, 0
      %p97 = por %p95, %p96
      %p98 = scmp.ne.s32.totalorder %s90, %s92
      %p99 = scmp.eq.s32.totalorder %s19, 1
      %p100 = por %p98, %p99
      %p101 = scmp.ne.s32.totalorder %s92, %s93
      %p102 = scmp.eq.s32.totalorder %s19, 0
      %p103 = por %p101, %p102
      %p104 = scmp.ne.s32.totalorder %s92, %s93
      %p105 = scmp.eq.s32.totalorder %s20, 1
      %p106 = por %p104, %p105
      %p108 = scmp.ne.s32.totalorder %s93, %s107
      %p109 = scmp.eq.s32.totalorder %s20, 0
      %p110 = por %p108, %p109
      %s112 = sadd.s32 %s111, 1
      %p115 = scmp.eq.s32.totalorder %s14, 1
      %p116 = scmp.ne.s32.totalorder %s111, %s113
      %p117 = scmp.eq.s32.totalorder %s14, 0
      %p118 = por %p116, %p117
      %p119 = scmp.ne.s32.totalorder %s111, %s113
      %p120 = scmp.eq.s32.totalorder %s19, 1
      %p121 = por %p119, %p120
      %p122 = scmp.ne.s32.totalorder %s113, %s114
      %p123 = scmp.eq.s32.totalorder %s19, 0
      %p124 = por %p122, %p123
      %p125 = scmp.ne.s32.totalorder %s113, %s114
      %p126 = scmp.eq.s32.totalorder %s20, 1
      %p127 = por %p125, %p126
      %p129 = scmp.ne.s32.totalorder %s114, %s128
      %p130 = scmp.eq.s32.totalorder %s20, 0
      %p131 = por %p129, %p130
      %s133 = sadd.s32 %s132, 1
      %p136 = scmp.eq.s32.totalorder %s14, 1
      %p137 = scmp.ne.s32.totalorder %s132, %s134
      %p138 = scmp.eq.s32.totalorder %s14, 0
      %p139 = por %p137, %p138
      %p140 = scmp.ne.s32.totalorder %s132, %s134
      %p141 = scmp.eq.s32.totalorder %s19, 1
      %p142 = por %p140, %p141
      %p143 = scmp.ne.s32.totalorder %s134, %s135
      %p144 = scmp.eq.s32.totalorder %s19, 0
      %p145 = por %p143, %p144
      %p146 = scmp.ne.s32.totalorder %s134, %s135
      %p147 = scmp.eq.s32.totalorder %s20, 1
      %p148 = por %p146, %p147
      %p150 = scmp.ne.s32.totalorder %s135, %s149
      %p151 = scmp.eq.s32.totalorder %s20, 0
      %p152 = por %p150, %p151
      %s154 = sadd.s32 %s153, 1
      %p157 = scmp.eq.s32.totalorder %s14, 1
      %p158 = scmp.ne.s32.totalorder %s153, %s155
      %p159 = scmp.eq.s32.totalorder %s14, 0
      %p160 = por %p158, %p159
      %p161 = scmp.ne.s32.totalorder %s153, %s155
      %p162 = scmp.eq.s32.totalorder %s19, 1
      %p163 = por %p161, %p162
      %p164 = scmp.ne.s32.totalorder %s155, %s156
      %p165 = scmp.eq.s32.totalorder %s19, 0
      %p166 = por %p164, %p165
      %p167 = scmp.ne.s32.totalorder %s155, %s156
      %p168 = scmp.eq.s32.totalorder %s20, 1
      %p169 = por %p167, %p168
      %p171 = scmp.ne.s32.totalorder %s156, %s170
      %p172 = scmp.eq.s32.totalorder %s20, 0
      %p173 = por %p171, %p172
      %s174 = ssub.s32 %s14, %s21
      %p175 = scmp.eq.s32.totalorder %s174, 0
      %s177 = sadd.s32 %s176, 1
      %s178 = scalar_select %p175, %s176, %s177
      %p181 = pneg %p175
      %p182 = scmp.eq.s32.totalorder %s14, 1
      %p183 = por %p181, %p182
      %p184 = scmp.ne.s32.totalorder %s176, %s179
      %p185 = scmp.eq.s32.totalorder %s14, 0
      %p186 = por %p184, %p185
      %p187 = scmp.ne.s32.totalorder %s176, %s179
      %p188 = scmp.eq.s32.totalorder %s19, 1
      %p189 = por %p187, %p188
      %p190 = scmp.ne.s32.totalorder %s179, %s180
      %p191 = scmp.eq.s32.totalorder %s19, 0
      %p192 = por %p190, %p191
      %p193 = scmp.ne.s32.totalorder %s179, %s180
      %p194 = scmp.eq.s32.totalorder %s20, 1
      %p195 = por %p193, %p194
      %p197 = scmp.ne.s32.totalorder %s180, %s196
      %p198 = scmp.eq.s32.totalorder %s20, 0
      %p199 = por %p197, %p198
      %p200 = scmp.le.s32.totalorder 1, %s14
      %p201 = scmp.lt.s32.totalorder %s14, 3
      %p202 = pnand %p200, %p201
      %p203 = pneg %p202
      // Predicated region
      $region9: #{reduced_nn_forward.1} parent=5 // pred_check
        _
      $region10: #{reduced_nn_forward.1} parent=5 // pred_check_branch
        %205 = sbr.rel (%p202) target = $region12
      $region11: #{reduced_nn_forward.1} parent=5 // pred_region
        %s206 = ssub.s32 %s14, 1
        // Predicated region
        $region13: #{reduced_nn_forward.1} parent=11 // pred_check
          %p207 = pneg %p61
        $region14: #{reduced_nn_forward.1} parent=11 // pred_check_branch
          %209 = sbr.rel (%p207) target = $region16
        $region15: #{reduced_nn_forward.1} parent=11 // pred_region
          _
        $region16: #{reduced_nn_forward.1} parent=11 // pred_fallthru
          _
        // Predicated region
        $region17: #{reduced_nn_forward.1} parent=11 // pred_check
          %p210 = pneg %p82
        $region18: #{reduced_nn_forward.1} parent=11 // pred_check_branch
          %212 = sbr.rel (%p210) target = $region20
        $region19: #{reduced_nn_forward.1} parent=11 // pred_region
          _
        $region20: #{reduced_nn_forward.1} parent=11 // pred_fallthru
          _
        // Predicated region
        $region21: #{reduced_nn_forward.1} parent=11 // pred_check
          %p213 = pneg %p103
        $region22: #{reduced_nn_forward.1} parent=11 // pred_check_branch
          %215 = sbr.rel (%p213) target = $region24
        $region23: #{reduced_nn_forward.1} parent=11 // pred_region
          _
        $region24: #{reduced_nn_forward.1} parent=11 // pred_fallthru
          _
        // Predicated region
        $region25: #{reduced_nn_forward.1} parent=11 // pred_check
          %p216 = pneg %p124
        $region26: #{reduced_nn_forward.1} parent=11 // pred_check_branch
          %218 = sbr.rel (%p216) target = $region28
        $region27: #{reduced_nn_forward.1} parent=11 // pred_region
          _
        $region28: #{reduced_nn_forward.1} parent=11 // pred_fallthru
          _
        // Predicated region
        $region29: #{reduced_nn_forward.1} parent=11 // pred_check
          %p219 = pneg %p145
        $region30: #{reduced_nn_forward.1} parent=11 // pred_check_branch
          %221 = sbr.rel (%p219) target = $region32
        $region31: #{reduced_nn_forward.1} parent=11 // pred_region
          %s223 = ssub.s32 1024, 1024
          %224 = vsyncadd [#allocation3], %s223
          %s225 = sshll.u32 [#allocation2], 4
          %s226 = int_to_ptr.vmem [resolvable:$true] %s225
          %231 = dma.hbm_to_vmem [thread:$0]  %s5, 1024, %s226, [#allocation3], 64, 64, 4
        $region32: #{reduced_nn_forward.1} parent=11 // pred_fallthru
          _
        // Predicated region
        $region33: #{reduced_nn_forward.1} parent=11 // pred_check
          %p232 = pneg %p166
        $region34: #{reduced_nn_forward.1} parent=11 // pred_check_branch
          %234 = sbr.rel (%p232) target = $region36
        $region35: #{reduced_nn_forward.1} parent=11 // pred_region
          _
        $region36: #{reduced_nn_forward.1} parent=11 // pred_fallthru
          _
      $region12: #{reduced_nn_forward.1} parent=5 // pred_fallthru
        _
      %p235 = scmp.lt.s32.totalorder %s14, 2
      // Predicated region
      $region37: #{reduced_nn_forward.1} parent=5 // pred_check
        %p236 = pneg %p235
      $region38: #{reduced_nn_forward.1} parent=5 // pred_check_branch
        %238 = sbr.rel (%p236) target = $region40
      $region39: #{reduced_nn_forward.1} parent=5 // pred_region
        // Predicated region
        $region41: #{reduced_nn_forward.1} parent=39 // pred_check
          %p239 = pneg %p34
        $region42: #{reduced_nn_forward.1} parent=39 // pred_check_branch
          %241 = sbr.rel (%p239) target = $region44
        $region43: #{reduced_nn_forward.1} parent=39 // pred_region
          %s242 = smul.u32 4, %s14
          %p243 = scmp.lt.s32.totalorder %s242, 7
          %s244 = scalar_select %p243, %s242, 7
          %s245 = smul.addr %s244, 8
          %s246 = scalar_lea.vmem %s0, %s245
          %s247 = smul.u32 4, %s14
        $region44: #{reduced_nn_forward.1} parent=39 // pred_fallthru
          _
      $region40: #{reduced_nn_forward.1} parent=5 // pred_fallthru
        _
      %p248 = scmp.le.s32.totalorder 1, %s14
      %p249 = scmp.lt.s32.totalorder %s14, 3
      %p250 = pnand %p248, %p249
      %p251 = pneg %p250
      // Predicated region
      $region45: #{reduced_nn_forward.1} parent=5 // pred_check
        _
      $region46: #{reduced_nn_forward.1} parent=5 // pred_check_branch
        %253 = sbr.rel (%p250) target = $region48
      $region47: #{reduced_nn_forward.1} parent=5 // pred_region
        %s254 = ssub.s32 %s14, 1
        // Predicated region
        $region49: #{reduced_nn_forward.1} parent=47 // pred_check
          %p255 = pneg %p145
        $region50: #{reduced_nn_forward.1} parent=47 // pred_check_branch
          %257 = sbr.rel (%p255) target = $region52
        $region51: #{reduced_nn_forward.1} parent=47 // pred_region
          %258 = dma.done [#allocation3], 1024
        $region52: #{reduced_nn_forward.1} parent=47 // pred_fallthru
          _
        %s259 = smul.u32 4, %s19
        %p260 = scmp.lt.s32.totalorder %s259, 7
        %s261 = scalar_select %p260, %s259, 7
        %s262 = smul.addr %s261, 8
        %s263 = scalar_lea.vmem %s0, %s262
        %p264 = pneg %p40
        %p265 = pneg %p37
        %p266 = pneg %p61
        %p267 = pneg %p58
        %p268 = pneg %p82
        %p269 = pneg %p79
        %p270 = pneg %p103
        %p271 = pneg %p100
        %p272 = pneg %p124
        %p273 = pneg %p121
        %p274 = pneg %p145
        %p275 = pneg %p142
        %p276 = pneg %p166
        %p277 = pneg %p163
        %p278 = pneg %p192
        %p279 = pneg %p189
        %s280 = smul.u32 4, %s19
        %p281 = scmp.lt.s32.totalorder %s280, 7
        %s282 = scalar_select %p281, %s280, 7
        %s283 = smul.addr %s282, 8
        %s284 = scalar_lea.vmem %s7, %s283
        %s285 = smul.u32 4, %s19
        %p286 = scmp.lt.s32.totalorder %s285, 7
        %s287 = scalar_select %p286, %s285, 7
        %s288 = smul.addr %s287, 8
        %s289 = scalar_lea.vmem %s0, %s288
        %s290 = smul.u32 4, %s19
        %s291 = smul.u32 4, %s19
        %p292 = scmp.lt.s32.totalorder %s291, 7
        %s293 = scalar_select %p292, %s291, 7
        %s294 = smul.addr %s293, 8
        %s295 = scalar_lea.vmem %s7, %s294
        %s296 = smul.u32 4, %s19
        %v298 = vld [vmem:[%s289] sm:$0xff]
        %v299 = vld [vmem:[%s289 + $0x8] sm:$0xff]
        %v300 = vld [vmem:[%s289 + $0x10] sm:$0xff]
        %v301 = vld [vmem:[%s289 + $0x18] sm:$0xff]
        %v302 = vpack.c.bf16 %v299, %v298
        %v303 = vpack.c.bf16 %v301, %v300
        %v304 = vld [vmem:[%s1] sm:$0xf]
        %v305 = vld [vmem:[%s1 + $0x4] sm:$0xf]
        %v306 = vld [vmem:[%s2] sm:$0x1]
        %v308 = vlaneseq
        %v309 = vshrl.u32 %v308, 7
        %v310 = vsub.s32 0, %v309
        %v311 = vrot.slane %v306, %v310
        %v315 = vunpack.c.l.b16 %v304
        %v316 = vunpack.c.l.b16 %v305
        %v317 = vpack.c.b16 %v316, %v315
        %vm319 = vcmask 130048
        %v321 = vsel %vm319, %v302, 0
        %v324 = vsel %vm319, %v303, 0
        %326 = vmatprep.subr.bf16.mxu0 0
        %327 = vmatpush1.bf16.msra.mxu0 %v317
        %328 = vmatprep.subr.bf16.mxu0 0
        %329 = vmatpush1.bf16.msra.mxu0 0
        %330 = vmatprep.subr.bf16.mxu0 0
        %331 = vmatpush1.bf16.msra.mxu0 0
        %332 = vmatprep.subr.bf16.mxu0 0
        %333 = vmatpush1.bf16.msra.mxu0 0
        %334 = vmatprep.subr.bf16.mxu0 0
        %335 = vmatpush1.bf16.msra.mxu0 0
        %336 = vmatprep.subr.bf16.mxu0 0
        %337 = vmatpush1.bf16.msra.mxu0 0
        %338 = vmatprep.subr.bf16.mxu0 0
        %339 = vmatpush1.bf16.msra.mxu0 0
        %340 = vmatprep.subr.bf16.mxu0 0
        %341 = vmatpush1.bf16.msra.mxu0 0
        %342 = vmatprep.subr.bf16.mxu0 0
        %343 = vmatpush1.bf16.msra.mxu0 0
        %344 = vmatprep.subr.bf16.mxu0 0
        %345 = vmatpush1.bf16.msra.mxu0 0
        %346 = vmatprep.subr.bf16.mxu0 0
        %347 = vmatpush1.bf16.msra.mxu0 0
        %348 = vmatprep.subr.bf16.mxu0 0
        %349 = vmatpush1.bf16.msra.mxu0 0
        %350 = vmatprep.subr.bf16.mxu0 0
        %351 = vmatpush1.bf16.msra.mxu0 0
        %352 = vmatprep.subr.bf16.mxu0 0
        %353 = vmatpush1.bf16.msra.mxu0 0
        %354 = vmatprep.subr.bf16.mxu0 0
        %355 = vmatpush1.bf16.msra.mxu0 0
        %356 = vmatprep.subr.bf16.mxu0 0
        %357 = vmatpush1.bf16.msra.mxu0 0
        %358 = vmatprep.mubr.bf16.mxu0 0
        %359 = vmatmul.mubr.bf16.gmra.mrb[0].mxu0 %v321
        %v360 = vpop.f32.mrb[0].mxu0
        %v361 = vadd.f32 %v311, %v360
        %v362 = vpop.f32.mrb[0].mxu0
        %v363 = vpop.f32.mrb[0].mxu0
        %v364 = vadd.f32 %v311, %v363
        %v365 = vpop.f32.mrb[0].mxu0
        %366 = vmatprep.mubr.bf16.mxu0 0
        %367 = vmatmul.mubr.bf16.gmra.mrb[0].mxu0 %v324
        %v368 = vpop.f32.mrb[0].mxu0
        %v369 = vadd.f32 %v311, %v368
        %v370 = vpop.f32.mrb[0].mxu0
        %v371 = vpop.f32.mrb[0].mxu0
        %v372 = vadd.f32 %v311, %v371
        %v373 = vpop.f32.mrb[0].mxu0
        %374 = vdwg.mxu0
        %v375 = vmax.f32 %v361, 0.0
        %v376 = vmax.f32 %v364, 0.0
        %v377 = vmax.f32 %v369, 0.0
        %v378 = vmax.f32 %v372, 0.0
        %v379 = vpack.c.bf16 %v376, %v375
        %v380 = vpack.c.bf16 %v378, %v377
        %v381 = vld [vmem:[%s3] sm:$0xf]
        %v382 = vld [vmem:[%s3 + $0x4] sm:$0xf]
        %v383 = vld [vmem:[%s3 + $0x8] sm:$0xf]
        %v384 = vld [vmem:[%s3 + $0xc] sm:$0xf]
        %v385 = vld [vmem:[%s3 + $0x10] sm:$0xf]
        %v386 = vld [vmem:[%s3 + $0x14] sm:$0xf]
        %v387 = vld [vmem:[%s3 + $0x18] sm:$0xf]
        %v388 = vld [vmem:[%s3 + $0x1c] sm:$0xf]
        %v389 = vld [vmem:[%s3 + $0x20] sm:$0xf]
        %v390 = vld [vmem:[%s3 + $0x24] sm:$0xf]
        %v391 = vld [vmem:[%s3 + $0x28] sm:$0xf]
        %v392 = vld [vmem:[%s3 + $0x2c] sm:$0xf]
        %v393 = vld [vmem:[%s3 + $0x30] sm:$0xf]
        %v394 = vld [vmem:[%s3 + $0x34] sm:$0xf]
        %v395 = vld [vmem:[%s3 + $0x38] sm:$0xf]
        %v396 = vld [vmem:[%s3 + $0x3c] sm:$0xf]
        %v397 = vld [vmem:[%s4] sm:$0x1]
        %v399 = vlaneseq
        %v400 = vshrl.u32 %v399, 7
        %v401 = vsub.s32 0, %v400
        %v402 = vrot.slane %v397, %v401
        %v420 = vunpack.c.l.b16 %v381
        %v421 = vunpack.c.l.b16 %v382
        %v422 = vunpack.c.l.b16 %v383
        %v423 = vunpack.c.l.b16 %v384
        %v424 = vunpack.c.l.b16 %v385
        %v425 = vunpack.c.l.b16 %v386
        %v426 = vunpack.c.l.b16 %v387
        %v427 = vunpack.c.l.b16 %v388
        %v428 = vunpack.c.l.b16 %v389
        %v429 = vunpack.c.l.b16 %v390
        %v430 = vunpack.c.l.b16 %v391
        %v431 = vunpack.c.l.b16 %v392
        %v432 = vunpack.c.l.b16 %v393
        %v433 = vunpack.c.l.b16 %v394
        %v434 = vunpack.c.l.b16 %v395
        %v435 = vunpack.c.l.b16 %v396
        %v436 = vpack.c.b16 %v421, %v420
        %v437 = vpack.c.b16 %v423, %v422
        %v438 = vpack.c.b16 %v425, %v424
        %v439 = vpack.c.b16 %v427, %v426
        %v440 = vpack.c.b16 %v429, %v428
        %v441 = vpack.c.b16 %v431, %v430
        %v442 = vpack.c.b16 %v433, %v432
        %v443 = vpack.c.b16 %v435, %v434
        %452 = vmatprep.subr.bf16.mxu0 0
        %453 = vmatpush1.bf16.msra.mxu0 %v436
        %454 = vmatprep.subr.bf16.mxu0 0
        %455 = vmatpush1.bf16.msra.mxu0 %v437
        %456 = vmatprep.subr.bf16.mxu0 0
        %457 = vmatpush1.bf16.msra.mxu0 %v438
        %458 = vmatprep.subr.bf16.mxu0 0
        %459 = vmatpush1.bf16.msra.mxu0 %v439
        %460 = vmatprep.subr.bf16.mxu0 0
        %461 = vmatpush1.bf16.msra.mxu0 %v440
        %462 = vmatprep.subr.bf16.mxu0 0
        %463 = vmatpush1.bf16.msra.mxu0 %v441
        %464 = vmatprep.subr.bf16.mxu0 0
        %465 = vmatpush1.bf16.msra.mxu0 %v442
        %466 = vmatprep.subr.bf16.mxu0 0
        %467 = vmatpush1.bf16.msra.mxu0 %v443
        %468 = vmatprep.subr.bf16.mxu0 0
        %469 = vmatpush1.bf16.msra.mxu0 0
        %470 = vmatprep.subr.bf16.mxu0 0
        %471 = vmatpush1.bf16.msra.mxu0 0
        %472 = vmatprep.subr.bf16.mxu0 0
        %473 = vmatpush1.bf16.msra.mxu0 0
        %474 = vmatprep.subr.bf16.mxu0 0
        %475 = vmatpush1.bf16.msra.mxu0 0
        %476 = vmatprep.subr.bf16.mxu0 0
        %477 = vmatpush1.bf16.msra.mxu0 0
        %478 = vmatprep.subr.bf16.mxu0 0
        %479 = vmatpush1.bf16.msra.mxu0 0
        %480 = vmatprep.subr.bf16.mxu0 0
        %481 = vmatpush1.bf16.msra.mxu0 0
        %482 = vmatprep.subr.bf16.mxu0 0
        %483 = vmatpush1.bf16.msra.mxu0 0
        %484 = vmatprep.mubr.bf16.mxu0 0
        %485 = vmatmul.mubr.bf16.gmra.mrb[0].mxu0 %v379
        %v486 = vpop.f32.mrb[0].mxu0
        %v487 = vadd.f32 %v402, %v486
        %v488 = vpop.f32.mrb[0].mxu0
        %v489 = vpop.f32.mrb[0].mxu0
        %v490 = vadd.f32 %v402, %v489
        %v491 = vpop.f32.mrb[0].mxu0
        %492 = vmatprep.mubr.bf16.mxu0 0
        %493 = vmatmul.mubr.bf16.gmra.mrb[0].mxu0 %v380
        %v494 = vpop.f32.mrb[0].mxu0
        %v495 = vadd.f32 %v402, %v494
        %v496 = vpop.f32.mrb[0].mxu0
        %v497 = vpop.f32.mrb[0].mxu0
        %v498 = vadd.f32 %v402, %v497
        %v499 = vpop.f32.mrb[0].mxu0
        %500 = vdwg.mxu0
        %v501 = vmax.f32 %v487, 0.0
        %v502 = vmax.f32 %v490, 0.0
        %v503 = vmax.f32 %v495, 0.0
        %v504 = vmax.f32 %v498, 0.0
        %v505 = vpack.c.bf16 %v502, %v501
        %v506 = vpack.c.bf16 %v504, %v503
        %v507 = vld [vmem:[#allocation2] sm:$0xf]
        %v508 = vld [vmem:[#allocation2 + $0x4] sm:$0xf]
        %v509 = vld [vmem:[#allocation2 + $0x8] sm:$0xf]
        %v510 = vld [vmem:[#allocation2 + $0xc] sm:$0xf]
        %v511 = vld [vmem:[#allocation2 + $0x10] sm:$0xf]
        %v512 = vld [vmem:[#allocation2 + $0x14] sm:$0xf]
        %v513 = vld [vmem:[#allocation2 + $0x18] sm:$0xf]
        %v514 = vld [vmem:[#allocation2 + $0x1c] sm:$0xf]
        %v515 = vld [vmem:[#allocation2 + $0x20] sm:$0xf]
        %v516 = vld [vmem:[#allocation2 + $0x24] sm:$0xf]
        %v517 = vld [vmem:[#allocation2 + $0x28] sm:$0xf]
        %v518 = vld [vmem:[#allocation2 + $0x2c] sm:$0xf]
        %v519 = vld [vmem:[#allocation2 + $0x30] sm:$0xf]
        %v520 = vld [vmem:[#allocation2 + $0x34] sm:$0xf]
        %v521 = vld [vmem:[#allocation2 + $0x38] sm:$0xf]
        %v522 = vld [vmem:[#allocation2 + $0x3c] sm:$0xf]
        %v523 = vld [vmem:[%s6] sm:$0x1]
        %v525 = vlaneseq
        %v526 = vshrl.u32 %v525, 7
        %v527 = vsub.s32 0, %v526
        %v528 = vrot.slane %v523, %v527
        %v546 = vunpack.c.l.b16 %v507
        %v547 = vunpack.c.l.b16 %v508
        %v548 = vunpack.c.l.b16 %v509
        %v549 = vunpack.c.l.b16 %v510
        %v550 = vunpack.c.l.b16 %v511
        %v551 = vunpack.c.l.b16 %v512
        %v552 = vunpack.c.l.b16 %v513
        %v553 = vunpack.c.l.b16 %v514
        %v554 = vunpack.c.l.b16 %v515
        %v555 = vunpack.c.l.b16 %v516
        %v556 = vunpack.c.l.b16 %v517
        %v557 = vunpack.c.l.b16 %v518
        %v558 = vunpack.c.l.b16 %v519
        %v559 = vunpack.c.l.b16 %v520
        %v560 = vunpack.c.l.b16 %v521
        %v561 = vunpack.c.l.b16 %v522
        %v562 = vpack.c.b16 %v547, %v546
        %v563 = vpack.c.b16 %v549, %v548
        %v564 = vpack.c.b16 %v551, %v550
        %v565 = vpack.c.b16 %v553, %v552
        %v566 = vpack.c.b16 %v555, %v554
        %v567 = vpack.c.b16 %v557, %v556
        %v568 = vpack.c.b16 %v559, %v558
        %v569 = vpack.c.b16 %v561, %v560
        %578 = vmatprep.subr.bf16.mxu0 0
        %579 = vmatpush1.bf16.msra.mxu0 %v562
        %580 = vmatprep.subr.bf16.mxu0 0
        %581 = vmatpush1.bf16.msra.mxu0 %v563
        %582 = vmatprep.subr.bf16.mxu0 0
        %583 = vmatpush1.bf16.msra.mxu0 %v564
        %584 = vmatprep.subr.bf16.mxu0 0
        %585 = vmatpush1.bf16.msra.mxu0 %v565
        %586 = vmatprep.subr.bf16.mxu0 0
        %587 = vmatpush1.bf16.msra.mxu0 %v566
        %588 = vmatprep.subr.bf16.mxu0 0
        %589 = vmatpush1.bf16.msra.mxu0 %v567
        %590 = vmatprep.subr.bf16.mxu0 0
        %591 = vmatpush1.bf16.msra.mxu0 %v568
        %592 = vmatprep.subr.bf16.mxu0 0
        %593 = vmatpush1.bf16.msra.mxu0 %v569
        %594 = vmatprep.subr.bf16.mxu0 0
        %595 = vmatpush1.bf16.msra.mxu0 0
        %596 = vmatprep.subr.bf16.mxu0 0
        %597 = vmatpush1.bf16.msra.mxu0 0
        %598 = vmatprep.subr.bf16.mxu0 0
        %599 = vmatpush1.bf16.msra.mxu0 0
        %600 = vmatprep.subr.bf16.mxu0 0
        %601 = vmatpush1.bf16.msra.mxu0 0
        %602 = vmatprep.subr.bf16.mxu0 0
        %603 = vmatpush1.bf16.msra.mxu0 0
        %604 = vmatprep.subr.bf16.mxu0 0
        %605 = vmatpush1.bf16.msra.mxu0 0
        %606 = vmatprep.subr.bf16.mxu0 0
        %607 = vmatpush1.bf16.msra.mxu0 0
        %608 = vmatprep.subr.bf16.mxu0 0
        %609 = vmatpush1.bf16.msra.mxu0 0
        %610 = vmatprep.mubr.bf16.mxu0 0
        %611 = vmatmul.mubr.bf16.gmra.mrb[0].mxu0 %v505
        %v612 = vpop.f32.mrb[0].mxu0
        %v613 = vadd.f32 %v528, %v612
        %v614 = vpop.f32.mrb[0].mxu0
        %v615 = vpop.f32.mrb[0].mxu0
        %v616 = vadd.f32 %v528, %v615
        %v617 = vpop.f32.mrb[0].mxu0
        %618 = vmatprep.mubr.bf16.mxu0 0
        %619 = vmatmul.mubr.bf16.gmra.mrb[0].mxu0 %v506
        %v620 = vpop.f32.mrb[0].mxu0
        %v621 = vadd.f32 %v528, %v620
        %v622 = vpop.f32.mrb[0].mxu0
        %v623 = vpop.f32.mrb[0].mxu0
        %v624 = vadd.f32 %v528, %v623
        %v625 = vpop.f32.mrb[0].mxu0
        %626 = vdwg.mxu0
        %vm627 = vcmask 31744
        %628 = vst.msk [vmem:[%s295] sm:$0xff] %vm627, %v613
        %629 = vst.msk [vmem:[%s295 + $0x8] sm:$0xff] %vm627, %v616
        %630 = vst.msk [vmem:[%s295 + $0x10] sm:$0xff] %vm627, %v621
        %631 = vst.msk [vmem:[%s295 + $0x18] sm:$0xff] %vm627, %v624
        %s632 = smul.u32 4, %s19
        %p633 = scmp.lt.s32.totalorder %s632, 7
        %s634 = scalar_select %p633, %s632, 7
        %s635 = smul.addr %s634, 8
        %s636 = scalar_lea.vmem %s7, %s635
        // Predicated region
        $region53: #{reduced_nn_forward.1} parent=47 // pred_check
          %p637 = pneg %p189
        $region54: #{reduced_nn_forward.1} parent=47 // pred_check_branch
          %639 = sbr.rel (%p637) target = $region56
        $region55: #{reduced_nn_forward.1} parent=47 // pred_region
          %s640 = smul.u32 4, %s19
        $region56: #{reduced_nn_forward.1} parent=47 // pred_fallthru
          _
      $region48: #{reduced_nn_forward.1} parent=5 // pred_fallthru
        _
      %p641 = scmp.le.s32.totalorder 2, %s14
      // Predicated region
      $region57: #{reduced_nn_forward.1} parent=5 // pred_check
        %p642 = pneg %p641
      $region58: #{reduced_nn_forward.1} parent=5 // pred_check_branch
        %644 = sbr.rel (%p642) target = $region60
      $region59: #{reduced_nn_forward.1} parent=5 // pred_region
        %s645 = ssub.s32 %s14, 2
        // Predicated region
        $region61: #{reduced_nn_forward.1} parent=59 // pred_check
          %p646 = pneg %p195
        $region62: #{reduced_nn_forward.1} parent=59 // pred_check_branch
          %648 = sbr.rel (%p646) target = $region64
        $region63: #{reduced_nn_forward.1} parent=59 // pred_region
          %s649 = smul.u32 4, %s20
          %p650 = scmp.lt.s32.totalorder %s649, 7
          %s651 = scalar_select %p650, %s649, 7
          %s652 = smul.addr %s651, 8
          %s653 = scalar_lea.vmem %s7, %s652
        $region64: #{reduced_nn_forward.1} parent=59 // pred_fallthru
          _
      $region60: #{reduced_nn_forward.1} parent=5 // pred_fallthru
        _
    $region6: #{reduced_nn_forward.1} parent=1 // loop_footer
      %s18 = sadd.s32 1, %s14
    $region7: #{reduced_nn_forward.1} parent=1 // loop_footer_branch
      %13 = sbr.rel target = $region3
    $region8: #{reduced_nn_forward.1} parent=1 // loop_exit
      _
    %654 = vsyncpa [#allocation3], 1
    %s655 = scalar_lea.sflag [#allocation3], 1
    %656 = vsyncpa %s655, 1

</llo_original>
